<compile_context>
chip_gen: v5e
topology: v5e:2x2
jax: 0.10.0
libtpu: 0.0.40
codegen_flags: <defaults>
</compile_context>

<pallas_src>
import functools

import jax
import jax.numpy as jnp
from jax.experimental import pallas as pl
from jax.experimental.pallas import tpu as pltpu


def _round_up(x, m):
    return ((x + m - 1) // m) * m


# ----------------------------------------------------------------------------
# Fused kernel: patch_fe (matmul + bias + ReLU) -> gcae on the last frame only.
# Single invocation for the whole batch.
# ----------------------------------------------------------------------------
def _patchmodel_fused_kernel(x_ref, wfe_ref, b_ref, we_ref, wd_ref,
                             feats_ref, reco_ref):
    # x_ref    : (N*T*V, C*W*H) bf16  flattened patches (batch folded into M)
    # wfe_ref  : (C*W*H, Fp)    bf16  patch_fe weight, zero-padded to Fp lanes
    # b_ref    : (1, Fp)        f32   patch_fe bias (zero-padded)
    # we_ref   : (Fp, Hp)       bf16  gcae encoder weight (zero-padded)
    # wd_ref   : (Hp, Fp)       bf16  gcae decoder weight (zero-padded)
    # feats_ref: (N*T*V, Fp)    f32   out: per-patch features (lane dense)
    # reco_ref : (N, V, Fp)     f32   out: decoded last-frame graphs
    n, v, _ = reco_ref.shape
    tv = feats_ref.shape[0] // n

    # patch_fe: one MXU matmul over the whole batch, f32 accumulation.
    feats = jnp.maximum(
        jnp.dot(x_ref[...], wfe_ref[...], preferred_element_type=jnp.float32)
        + b_ref[...], 0.0)                                     # (N*T*V, Fp) f32
    feats_ref[...] = feats

    we = we_ref[...]
    wd = wd_ref[...]

    def ring_avg(m):
        # A @ m for the normalized ring-with-self-loop adjacency:
        # (m[i-1] + m[i] + m[i+1]) / 3, done on the XLU instead of the MXU.
        return (m + pltpu.roll(m, shift=1, axis=0)
                  + pltpu.roll(m, shift=v - 1, axis=0)) * (1.0 / 3.0)

    # gcae on the last frame of each batch.  N is tiny (static Python loop);
    # the last-frame rows of batch b are [b*tv + tv - v, b*tv + tv)
    # (sublane-aligned: tv and tv - v are multiples of 8).
    for b in range(n):
        xg = feats[b * tv + tv - v: b * tv + tv, :]            # (V, Fp) f32
        ax = ring_avg(xg)                                      # (V, Fp) f32
        z = jnp.maximum(jnp.dot(ax.astype(we.dtype), we,
                                preferred_element_type=jnp.float32), 0.0)
        az = ring_avg(z)                                       # (V, Hp) f32
        reco_ref[b] = jnp.dot(az.astype(wd.dtype), wd,
                              preferred_element_type=jnp.float32)


# ----------------------------------------------------------------------------
# One-time parameter preparation (hoisted out of the per-call forward path):
# zero-pad feature/hidden dims to 128 lanes and cast MXU operands to bf16.
# ----------------------------------------------------------------------------
def prepare_params(params):
    f = params["w_fe"].shape[1]
    hd = params["w_enc"].shape[1]
    fp = _round_up(f, 128)
    hp = _round_up(hd, 128)
    return {
        "w_fe": jnp.pad(params["w_fe"], ((0, 0), (0, fp - f))).astype(jnp.bfloat16),
        "b_fe": jnp.pad(params["b_fe"], ((0, 0), (0, fp - f))),            # f32
        "w_enc": jnp.pad(params["w_enc"],
                         ((0, fp - f), (0, hp - hd))).astype(jnp.bfloat16),
        "w_dec": jnp.pad(params["w_dec"],
                         ((0, hp - hd), (0, fp - f))).astype(jnp.bfloat16),
    }


# ----------------------------------------------------------------------------
# PatchModel.forward (arch='gcae')
# ----------------------------------------------------------------------------
@functools.partial(jax.jit, static_argnames=("outdim",))
def patch_model_forward(x, kp, *, outdim):
    n, c, t, v, w, h = x.shape
    f = outdim
    tv, cwh = t * v, c * w * h
    fp = kp["w_fe"].shape[1]
    hp = kp["w_enc"].shape[1]

    # PyTorch's permute(0,2,3,1,4,5).view(N*T*V, C*W*H), fused with the bf16
    # cast of x (the cast already forces one wrapper pass over x, so the
    # transpose rides along for free and enables a single MXU matmul).
    x2d = jnp.transpose(x, (0, 2, 3, 1, 4, 5)).reshape(n * tv, cwh)
    x2d = x2d.astype(jnp.bfloat16)

    feats_p, reco_p = pl.pallas_call(
        _patchmodel_fused_kernel,
        out_shape=(
            jax.ShapeDtypeStruct((n * tv, fp), jnp.float32),   # patch features
            jax.ShapeDtypeStruct((n, v, fp), jnp.float32),     # last-frame reco
        ),
        grid=(1,),
        in_specs=[
            pl.BlockSpec((n * tv, cwh), lambda i: (0, 0)),
            pl.BlockSpec((cwh, fp), lambda i: (0, 0)),
            pl.BlockSpec((1, fp), lambda i: (0, 0)),
            pl.BlockSpec((fp, hp), lambda i: (0, 0)),
            pl.BlockSpec((hp, fp), lambda i: (0, 0)),
        ],
        out_specs=(
            pl.BlockSpec((n * tv, fp), lambda i: (0, 0)),
            pl.BlockSpec((n, v, fp), lambda i: (0, 0, 0)),
        ),
        compiler_params=pltpu.CompilerParams(
            dimension_semantics=("arbitrary",)),
    )(x2d, kp["w_fe"], kp["b_fe"], kp["w_enc"], kp["w_dec"])

    # Slice padding off and restore the PyTorch output conventions.
    feats = feats_p[:, :f].reshape(n, t, v, f)
    input_feature_graph = jnp.transpose(feats, (0, 3, 1, 2))                # (N, F, T, V)
    reco_graph = jnp.transpose(reco_p[..., :f], (0, 2, 1))[:, :, None, :]   # (N, F, 1, V)
    return reco_graph, input_feature_graph


# ----------------------------------------------------------------------------
# Pure-JAX reference of the same synthetic module (dense adjacency matmuls).
# operand_dtype=float32  -> the exact f32 module.
# operand_dtype=bfloat16 -> same operand quantization points as the kernel
#                           (for a tight structural check).
# ----------------------------------------------------------------------------
def patch_model_forward_ref(x, params, operand_dtype=jnp.float32):
    hi = jax.lax.Precision.HIGHEST
    qd = lambda a: a.astype(operand_dtype).astype(jnp.float32)
    n, c, t, v, w, h = x.shape
    x2d = jnp.transpose(x, (0, 2, 3, 1, 4, 5)).reshape(n * t * v, c * w * h)
    feats = jnp.maximum(
        jnp.dot(qd(x2d), qd(params["w_fe"]), precision=hi) + params["b_fe"], 0.0)
    f = feats.shape[-1]
    fg = feats.reshape(n, t, v, f)
    input_feature_graph = jnp.transpose(fg, (0, 3, 1, 2))
    a = params["adj"]
    xg = fg.reshape(n * t, v, f)
    ax = jnp.einsum("uv,bvf->buf", a, xg, precision=hi)
    z = jnp.maximum(jnp.einsum("bvf,fk->bvk", qd(ax), qd(params["w_enc"]),
                               precision=hi), 0.0)
    az = jnp.einsum("uv,bvk->buk", a, z, precision=hi)
    reco = jnp.einsum("bvk,kf->bvf", qd(az), qd(params["w_dec"]), precision=hi)
    reco_full = jnp.transpose(reco.reshape(n, t, v, f), (0, 3, 1, 2))
    return reco_full[:, :, -1:, :], input_feature_graph


# ----------------------------------------------------------------------------
# Deterministic parameter construction
# ----------------------------------------------------------------------------
def make_params(c, w, h, v, outdim, h_dim):
    key = jax.random.PRNGKey(0)
    k1, k2, k3, k4 = jax.random.split(key, 4)
    K = c * w * h
    w_fe = jax.random.normal(k1, (K, outdim), jnp.float32) * (1.0 / jnp.sqrt(K))
    b_fe = jax.random.normal(k2, (1, outdim), jnp.float32) * 0.01
    w_enc = jax.random.normal(k3, (outdim, h_dim), jnp.float32) * (1.0 / jnp.sqrt(outdim))
    w_dec = jax.random.normal(k4, (h_dim, outdim), jnp.float32) * (1.0 / jnp.sqrt(h_dim))
    # Normalized ring adjacency with self-loops over the V graph nodes.
    # (The kernel exploits exactly this structure via XLU rolls.)
    idx = jnp.arange(v)
    adj = (
        jnp.eye(v, dtype=jnp.float32)
        + (idx[:, None] == (idx[None, :] + 1) % v).astype(jnp.float32)
        + (idx[:, None] == (idx[None, :] - 1) % v).astype(jnp.float32)
    )
    adj = adj / adj.sum(axis=1, keepdims=True)
    return {"w_fe": w_fe, "b_fe": b_fe, "w_enc": w_enc, "w_dec": w_dec, "adj": adj}


if __name__ == "__main__":
    # Small shapes: N=2 batches, C=3 image channels, T=6 frames, V=8 graph
    # nodes, patch size W=H=16, patch feature dim (outdim) F=8, gcae hidden 16.
    n, c, t, v, w, h = 2, 3, 6, 8, 16, 16
    outdim, h_dim = 8, 16

    key = jax.random.PRNGKey(0)
    x = jax.random.normal(key, (n, c, t, v, w, h), jnp.float32)
    params = make_params(c, w, h, v, outdim, h_dim)
    kparams = prepare_params(params)          # one-time pad + bf16 cast (hoisted)

    reco_graph, feature_graph = patch_model_forward(x, kparams, outdim=outdim)
    jax.block_until_ready((reco_graph, feature_graph))

    assert reco_graph.shape == (n, outdim, 1, v), reco_graph.shape
    assert feature_graph.shape == (n, outdim, t, v), feature_graph.shape

    # Tight structural check: reference with the same bf16 operand quantization
    # -> remaining differences are only accumulation order (~1e-4).
    ref_reco_q, ref_fg_q = jax.jit(
        functools.partial(patch_model_forward_ref, operand_dtype=jnp.bfloat16)
    )(x, params)
    err_rq = float(jnp.max(jnp.abs(reco_graph - ref_reco_q)))
    err_fq = float(jnp.max(jnp.abs(feature_graph - ref_fg_q)))
    assert err_rq < 2e-2 and err_fq < 2e-2, (err_rq, err_fq)

    # Loose sanity check vs. the exact f32 module: budget covers the bf16
    # operand quantization (~2^-9 relative per operand, accumulated).
    ref_reco, ref_fg = jax.jit(patch_model_forward_ref)(x, params)
    err_r = float(jnp.max(jnp.abs(reco_graph - ref_reco)))
    err_f = float(jnp.max(jnp.abs(feature_graph - ref_fg)))
    assert err_r < 1.5e-1 and err_f < 1e-1, (err_r, err_f)

    print("KERNEL_OK")
</pallas_src>

<mosaic_0001>
module attributes {stable_mosaic.version = 11 : i64} {
  func.func @_patchmodel_fused_kernel(%arg0: i32, %arg1: memref<96x768xbf16, #tpu.memory_space<vmem>>, %arg2: memref<768x128xbf16, #tpu.memory_space<vmem>>, %arg3: memref<1x128xf32, #tpu.memory_space<vmem>>, %arg4: memref<128x128xbf16, #tpu.memory_space<vmem>>, %arg5: memref<128x128xbf16, #tpu.memory_space<vmem>>, %arg6: memref<96x128xf32, #tpu.memory_space<vmem>>, %arg7: memref<2x8x128xf32, #tpu.memory_space<vmem>>) attributes {dimension_semantics = [#tpu.dimension_semantics<arbitrary>], iteration_bounds = array<i64: 1>, scalar_prefetch = 0 : i64, scratch_operands = 0 : i64, tpu.core_type = #tpu.core_type<tc>, window_params = [{pipeline_mode = #tpu.pipeline_mode<synchronous>, transform_indices = @transform_0, window_bounds = array<i64: 96, 768>}, {pipeline_mode = #tpu.pipeline_mode<synchronous>, transform_indices = @transform_1, window_bounds = array<i64: 768, 128>}, {pipeline_mode = #tpu.pipeline_mode<synchronous>, transform_indices = @transform_2, window_bounds = array<i64: 1, 128>}, {pipeline_mode = #tpu.pipeline_mode<synchronous>, transform_indices = @transform_3, window_bounds = array<i64: 128, 128>}, {pipeline_mode = #tpu.pipeline_mode<synchronous>, transform_indices = @transform_4, window_bounds = array<i64: 128, 128>}, {pipeline_mode = #tpu.pipeline_mode<synchronous>, transform_indices = @transform_5, window_bounds = array<i64: 96, 128>}, {pipeline_mode = #tpu.pipeline_mode<synchronous>, transform_indices = @transform_6, window_bounds = array<i64: 2, 8, 128>}]} {
    %c0 = arith.constant 0 : index
    %c0_0 = arith.constant 0 : index
    %0 = vector.load %arg1[%c0, %c0_0] : memref<96x768xbf16, #tpu.memory_space<vmem>>, vector<96x768xbf16>
    %c0_1 = arith.constant 0 : index
    %c0_2 = arith.constant 0 : index
    %1 = vector.load %arg2[%c0_1, %c0_2] : memref<768x128xbf16, #tpu.memory_space<vmem>>, vector<768x128xbf16>
    %cst = arith.constant dense<0.000000e+00> : vector<96x128xf32>
    %2 = tpu.matmul %0, %1, %cst {dimension_numbers = #tpu.dot_dimension_numbers<[1], [0], [0], [1], [0, 0, 1, 1], [], []>} : vector<96x768xbf16>, vector<768x128xbf16>, vector<96x128xf32> -> vector<96x128xf32>
    %c0_3 = arith.constant 0 : index
    %c0_4 = arith.constant 0 : index
    %3 = vector.load %arg3[%c0_3, %c0_4] : memref<1x128xf32, #tpu.memory_space<vmem>>, vector<1x128xf32>
    %4 = vector.broadcast %3 : vector<1x128xf32> to vector<96x128xf32>
    %5 = arith.addf %2, %4 : vector<96x128xf32>
    %cst_5 = arith.constant 0.000000e+00 : f32
    %6 = vector.broadcast %cst_5 : f32 to vector<96x128xf32>
    %7 = arith.maximumf %5, %6 : vector<96x128xf32>
    %c0_6 = arith.constant 0 : index
    %c0_7 = arith.constant 0 : index
    %8 = vector.load %arg6[%c0_6, %c0_7] : memref<96x128xf32, #tpu.memory_space<vmem>>, vector<96x128xf32>
    tpu.vector_store %arg6[%c0_6, %c0_7], %7 {strides = array<i32>} : memref<96x128xf32, #tpu.memory_space<vmem>>, vector<96x128xf32>,
    %c0_8 = arith.constant 0 : index
    %c0_9 = arith.constant 0 : index
    %9 = vector.load %arg4[%c0_8, %c0_9] : memref<128x128xbf16, #tpu.memory_space<vmem>>, vector<128x128xbf16>
    %c0_10 = arith.constant 0 : index
    %c0_11 = arith.constant 0 : index
    %10 = vector.load %arg5[%c0_10, %c0_11] : memref<128x128xbf16, #tpu.memory_space<vmem>>, vector<128x128xbf16>
    %11 = vector.extract_strided_slice %7 {offsets = [40, 0], sizes = [8, 128], strides = [1, 1]} : vector<96x128xf32> to vector<8x128xf32>
    %c1_i32 = arith.constant 1 : i32
    %12 = tpu.dynamic_rotate %11 by %c1_i32 dim 0 : vector<8x128xf32>, i32 -> vector<8x128xf32>
    %13 = arith.addf %11, %12 : vector<8x128xf32>
    %c7_i32 = arith.constant 7 : i32
    %14 = tpu.dynamic_rotate %11 by %c7_i32 dim 0 : vector<8x128xf32>, i32 -> vector<8x128xf32>
    %15 = arith.addf %13, %14 : vector<8x128xf32>
    %cst_12 = arith.constant 0.333333343 : f32
    %16 = vector.broadcast %cst_12 : f32 to vector<8x128xf32>
    %17 = arith.mulf %15, %16 : vector<8x128xf32>
    %18 = arith.truncf %17 : vector<8x128xf32> to vector<8x128xbf16>
    %cst_13 = arith.constant dense<0.000000e+00> : vector<8x128xf32>
    %19 = tpu.matmul %18, %9, %cst_13 {dimension_numbers = #tpu.dot_dimension_numbers<[1], [0], [0], [1], [0, 0, 1, 1], [], []>} : vector<8x128xbf16>, vector<128x128xbf16>, vector<8x128xf32> -> vector<8x128xf32>
    %cst_14 = arith.constant 0.000000e+00 : f32
    %20 = vector.broadcast %cst_14 : f32 to vector<8x128xf32>
    %21 = arith.maximumf %19, %20 : vector<8x128xf32>
    %c1_i32_15 = arith.constant 1 : i32
    %22 = tpu.dynamic_rotate %21 by %c1_i32_15 dim 0 : vector<8x128xf32>, i32 -> vector<8x128xf32>
    %23 = arith.addf %21, %22 : vector<8x128xf32>
    %c7_i32_16 = arith.constant 7 : i32
    %24 = tpu.dynamic_rotate %21 by %c7_i32_16 dim 0 : vector<8x128xf32>, i32 -> vector<8x128xf32>
    %25 = arith.addf %23, %24 : vector<8x128xf32>
    %cst_17 = arith.constant 0.333333343 : f32
    %26 = vector.broadcast %cst_17 : f32 to vector<8x128xf32>
    %27 = arith.mulf %25, %26 : vector<8x128xf32>
    %28 = arith.truncf %27 : vector<8x128xf32> to vector<8x128xbf16>
    %cst_18 = arith.constant dense<0.000000e+00> : vector<8x128xf32>
    %29 = tpu.matmul %28, %10, %cst_18 {dimension_numbers = #tpu.dot_dimension_numbers<[1], [0], [0], [1], [0, 0, 1, 1], [], []>} : vector<8x128xbf16>, vector<128x128xbf16>, vector<8x128xf32> -> vector<8x128xf32>
    %c0_19 = arith.constant 0 : index
    %c0_20 = arith.constant 0 : index
    %c0_21 = arith.constant 0 : index
    %30 = vector.load %arg7[%c0_19, %c0_20, %c0_21] : memref<2x8x128xf32, #tpu.memory_space<vmem>>, vector<1x8x128xf32>
    %31 = vector.shape_cast %30 : vector<1x8x128xf32> to vector<8x128xf32>
    %32 = vector.shape_cast %29 : vector<8x128xf32> to vector<1x8x128xf32>
    tpu.vector_store %arg7[%c0_19, %c0_20, %c0_21], %32 {strides = array<i32>} : memref<2x8x128xf32, #tpu.memory_space<vmem>>, vector<1x8x128xf32>,
    %33 = vector.extract_strided_slice %7 {offsets = [88, 0], sizes = [8, 128], strides = [1, 1]} : vector<96x128xf32> to vector<8x128xf32>
    %c1_i32_22 = arith.constant 1 : i32
    %34 = tpu.dynamic_rotate %33 by %c1_i32_22 dim 0 : vector<8x128xf32>, i32 -> vector<8x128xf32>
    %35 = arith.addf %33, %34 : vector<8x128xf32>
    %c7_i32_23 = arith.constant 7 : i32
    %36 = tpu.dynamic_rotate %33 by %c7_i32_23 dim 0 : vector<8x128xf32>, i32 -> vector<8x128xf32>
    %37 = arith.addf %35, %36 : vector<8x128xf32>
    %cst_24 = arith.constant 0.333333343 : f32
    %38 = vector.broadcast %cst_24 : f32 to vector<8x128xf32>
    %39 = arith.mulf %37, %38 : vector<8x128xf32>
    %40 = arith.truncf %39 : vector<8x128xf32> to vector<8x128xbf16>
    %cst_25 = arith.constant dense<0.000000e+00> : vector<8x128xf32>
    %41 = tpu.matmul %40, %9, %cst_25 {dimension_numbers = #tpu.dot_dimension_numbers<[1], [0], [0], [1], [0, 0, 1, 1], [], []>} : vector<8x128xbf16>, vector<128x128xbf16>, vector<8x128xf32> -> vector<8x128xf32>
    %cst_26 = arith.constant 0.000000e+00 : f32
    %42 = vector.broadcast %cst_26 : f32 to vector<8x128xf32>
    %43 = arith.maximumf %41, %42 : vector<8x128xf32>
    %c1_i32_27 = arith.constant 1 : i32
    %44 = tpu.dynamic_rotate %43 by %c1_i32_27 dim 0 : vector<8x128xf32>, i32 -> vector<8x128xf32>
    %45 = arith.addf %43, %44 : vector<8x128xf32>
    %c7_i32_28 = arith.constant 7 : i32
    %46 = tpu.dynamic_rotate %43 by %c7_i32_28 dim 0 : vector<8x128xf32>, i32 -> vector<8x128xf32>
    %47 = arith.addf %45, %46 : vector<8x128xf32>
    %cst_29 = arith.constant 0.333333343 : f32
    %48 = vector.broadcast %cst_29 : f32 to vector<8x128xf32>
    %49 = arith.mulf %47, %48 : vector<8x128xf32>
    %50 = arith.truncf %49 : vector<8x128xf32> to vector<8x128xbf16>
    %cst_30 = arith.constant dense<0.000000e+00> : vector<8x128xf32>
    %51 = tpu.matmul %50, %10, %cst_30 {dimension_numbers = #tpu.dot_dimension_numbers<[1], [0], [0], [1], [0, 0, 1, 1], [], []>} : vector<8x128xbf16>, vector<128x128xbf16>, vector<8x128xf32> -> vector<8x128xf32>
    %c1 = arith.constant 1 : index
    %c0_31 = arith.constant 0 : index
    %c0_32 = arith.constant 0 : index
    %52 = vector.load %arg7[%c1, %c0_31, %c0_32] : memref<2x8x128xf32, #tpu.memory_space<vmem>>, vector<1x8x128xf32>
    %53 = vector.shape_cast %52 : vector<1x8x128xf32> to vector<8x128xf32>
    %54 = vector.shape_cast %51 : vector<8x128xf32> to vector<1x8x128xf32>
    tpu.vector_store %arg7[%c1, %c0_31, %c0_32], %54 {strides = array<i32>} : memref<2x8x128xf32, #tpu.memory_space<vmem>>, vector<1x8x128xf32>,
    return
  }
  func.func @transform_0(%arg0: i32) -> (i32, i32) {
    %c0_i32 = arith.constant 0 : i32
    %c0_i32_0 = arith.constant 0 : i32
    %c0_i32_1 = arith.constant 0 : i32
    return %c0_i32, %c0_i32_0 : i32, i32
  }
  func.func @transform_1(%arg0: i32) -> (i32, i32) {
    %c0_i32 = arith.constant 0 : i32
    %c0_i32_0 = arith.constant 0 : i32
    %c0_i32_1 = arith.constant 0 : i32
    return %c0_i32, %c0_i32_0 : i32, i32
  }
  func.func @transform_2(%arg0: i32) -> (i32, i32) {
    %c0_i32 = arith.constant 0 : i32
    %c0_i32_0 = arith.constant 0 : i32
    %c0_i32_1 = arith.constant 0 : i32
    return %c0_i32, %c0_i32_0 : i32, i32
  }
  func.func @transform_3(%arg0: i32) -> (i32, i32) {
    %c0_i32 = arith.constant 0 : i32
    %c0_i32_0 = arith.constant 0 : i32
    %c0_i32_1 = arith.constant 0 : i32
    return %c0_i32, %c0_i32_0 : i32, i32
  }
  func.func @transform_4(%arg0: i32) -> (i32, i32) {
    %c0_i32 = arith.constant 0 : i32
    %c0_i32_0 = arith.constant 0 : i32
    %c0_i32_1 = arith.constant 0 : i32
    return %c0_i32, %c0_i32_0 : i32, i32
  }
  func.func @transform_5(%arg0: i32) -> (i32, i32) {
    %c0_i32 = arith.constant 0 : i32
    %c0_i32_0 = arith.constant 0 : i32
    %c0_i32_1 = arith.constant 0 : i32
    return %c0_i32, %c0_i32_0 : i32, i32
  }
  func.func @transform_6(%arg0: i32) -> (i32, i32, i32) {
    %c0_i32 = arith.constant 0 : i32
    %c0_i32_0 = arith.constant 0 : i32
    %c0_i32_1 = arith.constant 0 : i32
    %c0_i32_2 = arith.constant 0 : i32
    return %c0_i32, %c0_i32_0, %c0_i32_1 : i32, i32, i32
  }
}

</mosaic_0001>

<llo_original>
// kernel: patch_model_forward.1
$region0: #{patch_model_forward.1}
  #allocation0 [shape = 'u32[]', space=smem, size = 0x4, offset = 0x4, fixed_abs, tag = 'smem constant byte address 0x4 - core index']
  #allocation1 [shape = 'u32[72,128]{1,0:T(1,128)}', space=vmem, size = 0x9000, scoped, tag = 'internal scratch']
  %s0 = inlined_call_operand.vmem [shape: bf16[96,768], index: 0, kind: input, shape index: {}]
  %s1 = inlined_call_operand.vmem [shape: bf16[768,128], index: 1, kind: input, shape index: {}]
  %s2 = inlined_call_operand.vmem [shape: f32[1,128], index: 2, kind: input, shape index: {}]
  %s3 = inlined_call_operand.vmem [shape: bf16[128,128], index: 3, kind: input, shape index: {}]
  %s4 = inlined_call_operand.vmem [shape: bf16[128,128], index: 4, kind: input, shape index: {}]
  %s5 = inlined_call_operand.vmem [shape: f32[96,128], index: 5, kind: output, shape index: {0}]
  %s6 = inlined_call_operand.vmem [shape: f32[2,8,128], index: 6, kind: output, shape index: {1}]
  %7 = xla_tuple %s5, %s6
  %s8 = sld [smem:[#allocation0]]
  $region38: #{patch_model_forward.1} parent=0
    _
  %s10 = ssub.s32 1, %s8
  %s11 = scalar_select 0, %s10, %s8
  // Predicated region
  $region2: #{patch_model_forward.1} parent=0 // pred_check
    _
  $region3: #{patch_model_forward.1} parent=0 // pred_check_branch
    %13 = sbr.rel (0) target = $region5
  $region4: #{patch_model_forward.1} parent=0 // pred_region
    _
  $region5: #{patch_model_forward.1} parent=0 // pred_fallthru
    _
  // Predicated region
  $region6: #{patch_model_forward.1} parent=0 // pred_check
    _
  $region7: #{patch_model_forward.1} parent=0 // pred_check_branch
    %15 = sbr.rel (0) target = $region9
  $region8: #{patch_model_forward.1} parent=0 // pred_region
    _
  $region9: #{patch_model_forward.1} parent=0 // pred_fallthru
    _
  // Predicated region
  $region10: #{patch_model_forward.1} parent=0 // pred_check
    _
  $region11: #{patch_model_forward.1} parent=0 // pred_check_branch
    %17 = sbr.rel (0) target = $region13
  $region12: #{patch_model_forward.1} parent=0 // pred_region
    _
  $region13: #{patch_model_forward.1} parent=0 // pred_fallthru
    _
  // Predicated region
  $region14: #{patch_model_forward.1} parent=0 // pred_check
    _
  $region15: #{patch_model_forward.1} parent=0 // pred_check_branch
    %19 = sbr.rel (0) target = $region17
  $region16: #{patch_model_forward.1} parent=0 // pred_region
    _
  $region17: #{patch_model_forward.1} parent=0 // pred_fallthru
    _
  // Predicated region
  $region18: #{patch_model_forward.1} parent=0 // pred_check
    _
  $region19: #{patch_model_forward.1} parent=0 // pred_check_branch
    %21 = sbr.rel (0) target = $region21
  $region20: #{patch_model_forward.1} parent=0 // pred_region
    _
  $region21: #{patch_model_forward.1} parent=0 // pred_fallthru
    _
  %v22 = vld [vmem:[%s0] sm:$0xff]
  %v23 = vld [vmem:[%s0 + $0x8] sm:$0xff]
  %v24 = vld [vmem:[%s0 + $0x10] sm:$0xff]
  %v25 = vld [vmem:[%s0 + $0x18] sm:$0xff]
  %v26 = vld [vmem:[%s0 + $0x20] sm:$0xff]
  %v27 = vld [vmem:[%s0 + $0x28] sm:$0xff]
  %v28 = vld [vmem:[%s0 + $0x30] sm:$0xff]
  %v29 = vld [vmem:[%s0 + $0x38] sm:$0xff]
  %v30 = vld [vmem:[%s0 + $0x40] sm:$0xff]
  %v31 = vld [vmem:[%s0 + $0x48] sm:$0xff]
  %v32 = vld [vmem:[%s0 + $0x50] sm:$0xff]
  %v33 = vld [vmem:[%s0 + $0x58] sm:$0xff]
  %v34 = vld [vmem:[%s0 + $0x60] sm:$0xff]
  %v35 = vld [vmem:[%s0 + $0x68] sm:$0xff]
  %v36 = vld [vmem:[%s0 + $0x70] sm:$0xff]
  %v37 = vld [vmem:[%s0 + $0x78] sm:$0xff]
  %v38 = vld [vmem:[%s0 + $0x80] sm:$0xff]
  %v39 = vld [vmem:[%s0 + $0x88] sm:$0xff]
  %v40 = vld [vmem:[%s0 + $0x90] sm:$0xff]
  %v41 = vld [vmem:[%s0 + $0x98] sm:$0xff]
  %v42 = vld [vmem:[%s0 + $0xa0] sm:$0xff]
  %v43 = vld [vmem:[%s0 + $0xa8] sm:$0xff]
  %v44 = vld [vmem:[%s0 + $0xb0] sm:$0xff]
  %v45 = vld [vmem:[%s0 + $0xb8] sm:$0xff]
  %v46 = vld [vmem:[%s0 + $0xc0] sm:$0xff]
  %v47 = vld [vmem:[%s0 + $0xc8] sm:$0xff]
  %v48 = vld [vmem:[%s0 + $0xd0] sm:$0xff]
  %v49 = vld [vmem:[%s0 + $0xd8] sm:$0xff]
  %v50 = vld [vmem:[%s0 + $0xe0] sm:$0xff]
  %v51 = vld [vmem:[%s0 + $0xe8] sm:$0xff]
  %v52 = vld [vmem:[%s0 + $0xf0] sm:$0xff]
  %v53 = vld [vmem:[%s0 + $0xf8] sm:$0xff]
  %v54 = vld [vmem:[%s0 + $0x100] sm:$0xff]
  %v55 = vld [vmem:[%s0 + $0x108] sm:$0xff]
  %v56 = vld [vmem:[%s0 + $0x110] sm:$0xff]
  %v57 = vld [vmem:[%s0 + $0x118] sm:$0xff]
  %v58 = vld [vmem:[%s1] sm:$0xf]
  %v59 = vld [vmem:[%s1 + $0x4] sm:$0xf]
  %v60 = vld [vmem:[%s1 + $0x8] sm:$0xf]
  %v61 = vld [vmem:[%s1 + $0xc] sm:$0xf]
  %v62 = vld [vmem:[%s1 + $0x10] sm:$0xf]
  %v63 = vld [vmem:[%s1 + $0x14] sm:$0xf]
  %v64 = vld [vmem:[%s1 + $0x18] sm:$0xf]
  %v65 = vld [vmem:[%s1 + $0x1c] sm:$0xf]
  %v66 = vld [vmem:[%s1 + $0x20] sm:$0xf]
  %v67 = vld [vmem:[%s1 + $0x24] sm:$0xf]
  %v68 = vld [vmem:[%s1 + $0x28] sm:$0xf]
  %v69 = vld [vmem:[%s1 + $0x2c] sm:$0xf]
  %v70 = vld [vmem:[%s1 + $0x30] sm:$0xf]
  %v71 = vld [vmem:[%s1 + $0x34] sm:$0xf]
  %v72 = vld [vmem:[%s1 + $0x38] sm:$0xf]
  %v73 = vld [vmem:[%s1 + $0x3c] sm:$0xf]
  %v74 = vld [vmem:[%s1 + $0x40] sm:$0xf]
  %v75 = vld [vmem:[%s1 + $0x44] sm:$0xf]
  %v76 = vld [vmem:[%s1 + $0x48] sm:$0xf]
  %v77 = vld [vmem:[%s1 + $0x4c] sm:$0xf]
  %v78 = vld [vmem:[%s1 + $0x50] sm:$0xf]
  %v79 = vld [vmem:[%s1 + $0x54] sm:$0xf]
  %v80 = vld [vmem:[%s1 + $0x58] sm:$0xf]
  %v81 = vld [vmem:[%s1 + $0x5c] sm:$0xf]
  %v82 = vld [vmem:[%s1 + $0x60] sm:$0xf]
  %v83 = vld [vmem:[%s1 + $0x64] sm:$0xf]
  %v84 = vld [vmem:[%s1 + $0x68] sm:$0xf]
  %v85 = vld [vmem:[%s1 + $0x6c] sm:$0xf]
  %v86 = vld [vmem:[%s1 + $0x70] sm:$0xf]
  %v87 = vld [vmem:[%s1 + $0x74] sm:$0xf]
  %v88 = vld [vmem:[%s1 + $0x78] sm:$0xf]
  %v89 = vld [vmem:[%s1 + $0x7c] sm:$0xf]
  %v90 = vld [vmem:[%s1 + $0x80] sm:$0xf]
  %v91 = vld [vmem:[%s1 + $0x84] sm:$0xf]
  %v92 = vld [vmem:[%s1 + $0x88] sm:$0xf]
  %v93 = vld [vmem:[%s1 + $0x8c] sm:$0xf]
  %v94 = vld [vmem:[%s1 + $0x90] sm:$0xf]
  %v95 = vld [vmem:[%s1 + $0x94] sm:$0xf]
  %v96 = vld [vmem:[%s1 + $0x98] sm:$0xf]
  %v97 = vld [vmem:[%s1 + $0x9c] sm:$0xf]
  %v98 = vld [vmem:[%s1 + $0xa0] sm:$0xf]
  %v99 = vld [vmem:[%s1 + $0xa4] sm:$0xf]
  %v100 = vld [vmem:[%s1 + $0xa8] sm:$0xf]
  %v101 = vld [vmem:[%s1 + $0xac] sm:$0xf]
  %v102 = vld [vmem:[%s1 + $0xb0] sm:$0xf]
  %v103 = vld [vmem:[%s1 + $0xb4] sm:$0xf]
  %v104 = vld [vmem:[%s1 + $0xb8] sm:$0xf]
  %v105 = vld [vmem:[%s1 + $0xbc] sm:$0xf]
  %v106 = vld [vmem:[%s1 + $0xc0] sm:$0xf]
  %v107 = vld [vmem:[%s1 + $0xc4] sm:$0xf]
  %v108 = vld [vmem:[%s1 + $0xc8] sm:$0xf]
  %v109 = vld [vmem:[%s1 + $0xcc] sm:$0xf]
  %v110 = vld [vmem:[%s1 + $0xd0] sm:$0xf]
  %v111 = vld [vmem:[%s1 + $0xd4] sm:$0xf]
  %v112 = vld [vmem:[%s1 + $0xd8] sm:$0xf]
  %v113 = vld [vmem:[%s1 + $0xdc] sm:$0xf]
  %v114 = vld [vmem:[%s1 + $0xe0] sm:$0xf]
  %v115 = vld [vmem:[%s1 + $0xe4] sm:$0xf]
  %v116 = vld [vmem:[%s1 + $0xe8] sm:$0xf]
  %v117 = vld [vmem:[%s1 + $0xec] sm:$0xf]
  %v118 = vld [vmem:[%s1 + $0xf0] sm:$0xf]
  %v119 = vld [vmem:[%s1 + $0xf4] sm:$0xf]
  %v120 = vld [vmem:[%s1 + $0xf8] sm:$0xf]
  %v121 = vld [vmem:[%s1 + $0xfc] sm:$0xf]
  %v122 = vld [vmem:[%s1 + $0x100] sm:$0xf]
  %v123 = vld [vmem:[%s1 + $0x104] sm:$0xf]
  %v124 = vld [vmem:[%s1 + $0x108] sm:$0xf]
  %v125 = vld [vmem:[%s1 + $0x10c] sm:$0xf]
  %v126 = vld [vmem:[%s1 + $0x110] sm:$0xf]
  %v127 = vld [vmem:[%s1 + $0x114] sm:$0xf]
  %v128 = vld [vmem:[%s1 + $0x118] sm:$0xf]
  %v129 = vld [vmem:[%s1 + $0x11c] sm:$0xf]
  %v130 = vld [vmem:[%s1 + $0x120] sm:$0xf]
  %v131 = vld [vmem:[%s1 + $0x124] sm:$0xf]
  %v132 = vld [vmem:[%s1 + $0x128] sm:$0xf]
  %v133 = vld [vmem:[%s1 + $0x12c] sm:$0xf]
  %v134 = vld [vmem:[%s1 + $0x130] sm:$0xf]
  %v135 = vld [vmem:[%s1 + $0x134] sm:$0xf]
  %v136 = vld [vmem:[%s1 + $0x138] sm:$0xf]
  %v137 = vld [vmem:[%s1 + $0x13c] sm:$0xf]
  %v138 = vld [vmem:[%s1 + $0x140] sm:$0xf]
  %v139 = vld [vmem:[%s1 + $0x144] sm:$0xf]
  %v140 = vld [vmem:[%s1 + $0x148] sm:$0xf]
  %v141 = vld [vmem:[%s1 + $0x14c] sm:$0xf]
  %v142 = vld [vmem:[%s1 + $0x150] sm:$0xf]
  %v143 = vld [vmem:[%s1 + $0x154] sm:$0xf]
  %v144 = vld [vmem:[%s1 + $0x158] sm:$0xf]
  %v145 = vld [vmem:[%s1 + $0x15c] sm:$0xf]
  %v146 = vld [vmem:[%s1 + $0x160] sm:$0xf]
  %v147 = vld [vmem:[%s1 + $0x164] sm:$0xf]
  %v148 = vld [vmem:[%s1 + $0x168] sm:$0xf]
  %v149 = vld [vmem:[%s1 + $0x16c] sm:$0xf]
  %v150 = vld [vmem:[%s1 + $0x170] sm:$0xf]
  %v151 = vld [vmem:[%s1 + $0x174] sm:$0xf]
  %v152 = vld [vmem:[%s1 + $0x178] sm:$0xf]
  %v153 = vld [vmem:[%s1 + $0x17c] sm:$0xf]
  %v154 = vld [vmem:[%s2] sm:$0x1]
  %v156 = vperm.slane %v154, 0
  %v194 = vunpack.c.l.b16 %v22
  %v195 = vunpack.c.h.b16 %v22
  %v196 = vunpack.c.l.b16 %v23
  %v197 = vunpack.c.h.b16 %v23
  %v198 = vunpack.c.l.b16 %v24
  %v199 = vunpack.c.h.b16 %v24
  %v200 = vunpack.c.l.b16 %v25
  %v201 = vunpack.c.h.b16 %v25
  %v202 = vunpack.c.l.b16 %v26
  %v203 = vunpack.c.h.b16 %v26
  %v204 = vunpack.c.l.b16 %v27
  %v205 = vunpack.c.h.b16 %v27
  %v206 = vunpack.c.l.b16 %v28
  %v207 = vunpack.c.h.b16 %v28
  %v208 = vunpack.c.l.b16 %v29
  %v209 = vunpack.c.h.b16 %v29
  %v210 = vunpack.c.l.b16 %v30
  %v211 = vunpack.c.h.b16 %v30
  %v212 = vunpack.c.l.b16 %v31
  %v213 = vunpack.c.h.b16 %v31
  %v214 = vunpack.c.l.b16 %v32
  %v215 = vunpack.c.h.b16 %v32
  %v216 = vunpack.c.l.b16 %v33
  %v217 = vunpack.c.h.b16 %v33
  %v218 = vunpack.c.l.b16 %v34
  %v219 = vunpack.c.h.b16 %v34
  %v220 = vunpack.c.l.b16 %v35
  %v221 = vunpack.c.h.b16 %v35
  %v222 = vunpack.c.l.b16 %v36
  %v223 = vunpack.c.h.b16 %v36
  %v224 = vunpack.c.l.b16 %v37
  %v225 = vunpack.c.h.b16 %v37
  %v226 = vunpack.c.l.b16 %v38
  %v227 = vunpack.c.h.b16 %v38
  %v228 = vunpack.c.l.b16 %v39
  %v229 = vunpack.c.h.b16 %v39
  %v230 = vunpack.c.l.b16 %v40
  %v231 = vunpack.c.h.b16 %v40
  %v232 = vunpack.c.l.b16 %v41
  %v233 = vunpack.c.h.b16 %v41
  %v234 = vunpack.c.l.b16 %v42
  %v235 = vunpack.c.h.b16 %v42
  %v236 = vunpack.c.l.b16 %v43
  %v237 = vunpack.c.h.b16 %v43
  %v238 = vunpack.c.l.b16 %v44
  %v239 = vunpack.c.h.b16 %v44
  %v240 = vunpack.c.l.b16 %v45
  %v241 = vunpack.c.h.b16 %v45
  %v242 = vunpack.c.l.b16 %v46
  %v243 = vunpack.c.h.b16 %v46
  %v244 = vunpack.c.l.b16 %v47
  %v245 = vunpack.c.h.b16 %v47
  %v246 = vunpack.c.l.b16 %v48
  %v247 = vunpack.c.h.b16 %v48
  %v248 = vunpack.c.l.b16 %v49
  %v249 = vunpack.c.h.b16 %v49
  %v250 = vunpack.c.l.b16 %v50
  %v251 = vunpack.c.h.b16 %v50
  %v252 = vunpack.c.l.b16 %v51
  %v253 = vunpack.c.h.b16 %v51
  %v254 = vunpack.c.l.b16 %v52
  %v255 = vunpack.c.h.b16 %v52
  %v256 = vunpack.c.l.b16 %v53
  %v257 = vunpack.c.h.b16 %v53
  %v258 = vunpack.c.l.b16 %v54
  %v259 = vunpack.c.h.b16 %v54
  %v260 = vunpack.c.l.b16 %v55
  %v261 = vunpack.c.h.b16 %v55
  %v262 = vunpack.c.l.b16 %v56
  %v263 = vunpack.c.h.b16 %v56
  %v264 = vunpack.c.l.b16 %v57
  %v265 = vunpack.c.h.b16 %v57
  %v266 = vpack.c.b16 %v200, %v194
  %v267 = vpack.c.b16 %v201, %v195
  %v268 = vpack.c.b16 %v202, %v196
  %v269 = vpack.c.b16 %v203, %v197
  %v270 = vpack.c.b16 %v204, %v198
  %v271 = vpack.c.b16 %v205, %v199
  %v272 = vpack.c.b16 %v212, %v206
  %v273 = vpack.c.b16 %v213, %v207
  %v274 = vpack.c.b16 %v214, %v208
  %v275 = vpack.c.b16 %v215, %v209
  %v276 = vpack.c.b16 %v216, %v210
  %v277 = vpack.c.b16 %v217, %v211
  %v278 = vpack.c.b16 %v224, %v218
  %v279 = vpack.c.b16 %v225, %v219
  %v280 = vpack.c.b16 %v226, %v220
  %v281 = vpack.c.b16 %v227, %v221
  %v282 = vpack.c.b16 %v228, %v222
  %v283 = vpack.c.b16 %v229, %v223
  %v284 = vpack.c.b16 %v236, %v230
  %v285 = vpack.c.b16 %v237, %v231
  %v286 = vpack.c.b16 %v238, %v232
  %v287 = vpack.c.b16 %v239, %v233
  %v288 = vpack.c.b16 %v240, %v234
  %v289 = vpack.c.b16 %v241, %v235
  %v290 = vpack.c.b16 %v248, %v242
  %v291 = vpack.c.b16 %v249, %v243
  %v292 = vpack.c.b16 %v250, %v244
  %v293 = vpack.c.b16 %v251, %v245
  %v294 = vpack.c.b16 %v252, %v246
  %v295 = vpack.c.b16 %v253, %v247
  %v296 = vpack.c.b16 %v260, %v254
  %v297 = vpack.c.b16 %v261, %v255
  %v298 = vpack.c.b16 %v262, %v256
  %v299 = vpack.c.b16 %v263, %v257
  %v300 = vpack.c.b16 %v264, %v258
  %v301 = vpack.c.b16 %v265, %v259
  %v434 = vunpack.c.l.b16 %v58
  %v435 = vunpack.c.l.b16 %v59
  %v436 = vunpack.c.l.b16 %v60
  %v437 = vunpack.c.l.b16 %v61
  %v438 = vunpack.c.l.b16 %v62
  %v439 = vunpack.c.l.b16 %v63
  %v440 = vunpack.c.l.b16 %v64
  %v441 = vunpack.c.l.b16 %v65
  %v442 = vunpack.c.l.b16 %v66
  %v443 = vunpack.c.l.b16 %v67
  %v444 = vunpack.c.l.b16 %v68
  %v445 = vunpack.c.l.b16 %v69
  %v446 = vunpack.c.l.b16 %v70
  %v447 = vunpack.c.l.b16 %v71
  %v448 = vunpack.c.l.b16 %v72
  %v449 = vunpack.c.l.b16 %v73
  %v450 = vunpack.c.l.b16 %v74
  %v451 = vunpack.c.l.b16 %v75
  %v452 = vunpack.c.l.b16 %v76
  %v453 = vunpack.c.l.b16 %v77
  %v454 = vunpack.c.l.b16 %v78
  %v455 = vunpack.c.l.b16 %v79
  %v456 = vunpack.c.l.b16 %v80
  %v457 = vunpack.c.l.b16 %v81
  %v458 = vunpack.c.l.b16 %v82
  %v459 = vunpack.c.l.b16 %v83
  %v460 = vunpack.c.l.b16 %v84
  %v461 = vunpack.c.l.b16 %v85
  %v462 = vunpack.c.l.b16 %v86
  %v463 = vunpack.c.l.b16 %v87
  %v464 = vunpack.c.l.b16 %v88
  %v465 = vunpack.c.l.b16 %v89
  %v466 = vunpack.c.l.b16 %v90
  %v467 = vunpack.c.l.b16 %v91
  %v468 = vunpack.c.l.b16 %v92
  %v469 = vunpack.c.l.b16 %v93
  %v470 = vunpack.c.l.b16 %v94
  %v471 = vunpack.c.l.b16 %v95
  %v472 = vunpack.c.l.b16 %v96
  %v473 = vunpack.c.l.b16 %v97
  %v474 = vunpack.c.l.b16 %v98
  %v475 = vunpack.c.l.b16 %v99
  %v476 = vunpack.c.l.b16 %v100
  %v477 = vunpack.c.l.b16 %v101
  %v478 = vunpack.c.l.b16 %v102
  %v479 = vunpack.c.l.b16 %v103
  %v480 = vunpack.c.l.b16 %v104
  %v481 = vunpack.c.l.b16 %v105
  %v482 = vunpack.c.l.b16 %v106
  %v483 = vunpack.c.l.b16 %v107
  %v484 = vunpack.c.l.b16 %v108
  %v485 = vunpack.c.l.b16 %v109
  %v486 = vunpack.c.l.b16 %v110
  %v487 = vunpack.c.l.b16 %v111
  %v488 = vunpack.c.l.b16 %v112
  %v489 = vunpack.c.l.b16 %v113
  %v490 = vunpack.c.l.b16 %v114
  %v491 = vunpack.c.l.b16 %v115
  %v492 = vunpack.c.l.b16 %v116
  %v493 = vunpack.c.l.b16 %v117
  %v494 = vunpack.c.l.b16 %v118
  %v495 = vunpack.c.l.b16 %v119
  %v496 = vunpack.c.l.b16 %v120
  %v497 = vunpack.c.l.b16 %v121
  %v498 = vunpack.c.l.b16 %v122
  %v499 = vunpack.c.l.b16 %v123
  %v500 = vunpack.c.l.b16 %v124
  %v501 = vunpack.c.l.b16 %v125
  %v502 = vunpack.c.l.b16 %v126
  %v503 = vunpack.c.l.b16 %v127
  %v504 = vunpack.c.l.b16 %v128
  %v505 = vunpack.c.l.b16 %v129
  %v506 = vunpack.c.l.b16 %v130
  %v507 = vunpack.c.l.b16 %v131
  %v508 = vunpack.c.l.b16 %v132
  %v509 = vunpack.c.l.b16 %v133
  %v510 = vunpack.c.l.b16 %v134
  %v511 = vunpack.c.l.b16 %v135
  %v512 = vunpack.c.l.b16 %v136
  %v513 = vunpack.c.l.b16 %v137
  %v514 = vunpack.c.l.b16 %v138
  %v515 = vunpack.c.l.b16 %v139
  %v516 = vunpack.c.l.b16 %v140
  %v517 = vunpack.c.l.b16 %v141
  %v518 = vunpack.c.l.b16 %v142
  %v519 = vunpack.c.l.b16 %v143
  %v520 = vunpack.c.l.b16 %v144
  %v521 = vunpack.c.l.b16 %v145
  %v522 = vunpack.c.l.b16 %v146
  %v523 = vunpack.c.l.b16 %v147
  %v524 = vunpack.c.l.b16 %v148
  %v525 = vunpack.c.l.b16 %v149
  %v526 = vunpack.c.l.b16 %v150
  %v527 = vunpack.c.l.b16 %v151
  %v528 = vunpack.c.l.b16 %v152
  %v529 = vunpack.c.l.b16 %v153
  %v530 = vpack.c.b16 %v435, %v434
  %v531 = vpack.c.b16 %v437, %v436
  %v532 = vpack.c.b16 %v439, %v438
  %v533 = vpack.c.b16 %v441, %v440
  %v534 = vpack.c.b16 %v443, %v442
  %v535 = vpack.c.b16 %v445, %v444
  %v536 = vpack.c.b16 %v447, %v446
  %v537 = vpack.c.b16 %v449, %v448
  %v538 = vpack.c.b16 %v451, %v450
  %v539 = vpack.c.b16 %v453, %v452
  %v540 = vpack.c.b16 %v455, %v454
  %v541 = vpack.c.b16 %v457, %v456
  %v542 = vpack.c.b16 %v459, %v458
  %v543 = vpack.c.b16 %v461, %v460
  %v544 = vpack.c.b16 %v463, %v462
  %v545 = vpack.c.b16 %v465, %v464
  %v546 = vpack.c.b16 %v467, %v466
  %v547 = vpack.c.b16 %v469, %v468
  %v548 = vpack.c.b16 %v471, %v470
  %v549 = vpack.c.b16 %v473, %v472
  %v550 = vpack.c.b16 %v475, %v474
  %v551 = vpack.c.b16 %v477, %v476
  %v552 = vpack.c.b16 %v479, %v478
  %v553 = vpack.c.b16 %v481, %v480
  %v554 = vpack.c.b16 %v483, %v482
  %v555 = vpack.c.b16 %v485, %v484
  %v556 = vpack.c.b16 %v487, %v486
  %v557 = vpack.c.b16 %v489, %v488
  %v558 = vpack.c.b16 %v491, %v490
  %v559 = vpack.c.b16 %v493, %v492
  %v560 = vpack.c.b16 %v495, %v494
  %v561 = vpack.c.b16 %v497, %v496
  %v562 = vpack.c.b16 %v499, %v498
  %v563 = vpack.c.b16 %v501, %v500
  %v564 = vpack.c.b16 %v503, %v502
  %v565 = vpack.c.b16 %v505, %v504
  %v566 = vpack.c.b16 %v507, %v506
  %v567 = vpack.c.b16 %v509, %v508
  %v568 = vpack.c.b16 %v511, %v510
  %v569 = vpack.c.b16 %v513, %v512
  %v570 = vpack.c.b16 %v515, %v514
  %v571 = vpack.c.b16 %v517, %v516
  %v572 = vpack.c.b16 %v519, %v518
  %v573 = vpack.c.b16 %v521, %v520
  %v574 = vpack.c.b16 %v523, %v522
  %v575 = vpack.c.b16 %v525, %v524
  %v576 = vpack.c.b16 %v527, %v526
  %v577 = vpack.c.b16 %v529, %v528
  %626 = vmatpush.bf16.msra.mxu0 %v537
  %627 = vmatpush.bf16.msra.mxu0 %v536
  %628 = vmatpush.bf16.msra.mxu0 %v535
  %629 = vmatpush.bf16.msra.mxu0 %v534
  %630 = vmatpush.bf16.msra.mxu0 %v533
  %631 = vmatpush.bf16.msra.mxu0 %v532
  %632 = vmatpush.bf16.msra.mxu0 %v531
  %633 = vmatpush.bf16.msra.mxu0 %v530
  %634 = vmatmul.bf16.gmra.mxu0 %v266
  %v635 = vpop.f32.mrf.mxu0
  %v636 = vadd.f32 %v156, %v635
  %v637 = vpop.f32.mrf.mxu0
  %v638 = vadd.f32 %v156, %v637
  %639 = vmatmul.bf16.gmra.mxu0 %v272
  %v640 = vpop.f32.mrf.mxu0
  %v641 = vadd.f32 %v156, %v640
  %v642 = vpop.f32.mrf.mxu0
  %v643 = vadd.f32 %v156, %v642
  %644 = vmatmul.bf16.gmra.mxu0 %v278
  %v645 = vpop.f32.mrf.mxu0
  %v646 = vadd.f32 %v156, %v645
  %v647 = vpop.f32.mrf.mxu0
  %v648 = vadd.f32 %v156, %v647
  %649 = vmatmul.bf16.gmra.mxu0 %v284
  %v650 = vpop.f32.mrf.mxu0
  %v651 = vadd.f32 %v156, %v650
  %v652 = vpop.f32.mrf.mxu0
  %v653 = vadd.f32 %v156, %v652
  %654 = vmatmul.bf16.gmra.mxu0 %v290
  %v655 = vpop.f32.mrf.mxu0
  %v656 = vadd.f32 %v156, %v655
  %v657 = vpop.f32.mrf.mxu0
  %v658 = vadd.f32 %v156, %v657
  %659 = vmatmul.bf16.gmra.mxu0 %v296
  %v660 = vpop.f32.mrf.mxu0
  %v661 = vadd.f32 %v156, %v660
  %v662 = vpop.f32.mrf.mxu0
  %v663 = vadd.f32 %v156, %v662
  %664 = vdwg.mxu0
  %665 = vmatpush.bf16.msra.mxu0 %v545
  %666 = vmatpush.bf16.msra.mxu0 %v544
  %667 = vmatpush.bf16.msra.mxu0 %v543
  %668 = vmatpush.bf16.msra.mxu0 %v542
  %669 = vmatpush.bf16.msra.mxu0 %v541
  %670 = vmatpush.bf16.msra.mxu0 %v540
  %671 = vmatpush.bf16.msra.mxu0 %v539
  %672 = vmatpush.bf16.msra.mxu0 %v538
  %673 = vmatmul.bf16.gmra.mxu0 %v267
  %v674 = vpop.f32.mrf.mxu0
  %v675 = vadd.f32 %v636, %v674
  %v676 = vpop.f32.mrf.mxu0
  %v677 = vadd.f32 %v638, %v676
  %678 = vmatmul.bf16.gmra.mxu0 %v273
  %v679 = vpop.f32.mrf.mxu0
  %v680 = vadd.f32 %v641, %v679
  %v681 = vpop.f32.mrf.mxu0
  %v682 = vadd.f32 %v643, %v681
  %683 = vmatmul.bf16.gmra.mxu0 %v279
  %v684 = vpop.f32.mrf.mxu0
  %v685 = vadd.f32 %v646, %v684
  %v686 = vpop.f32.mrf.mxu0
  %v687 = vadd.f32 %v648, %v686
  %688 = vmatmul.bf16.gmra.mxu0 %v285
  %v689 = vpop.f32.mrf.mxu0
  %v690 = vadd.f32 %v651, %v689
  %v691 = vpop.f32.mrf.mxu0
  %v692 = vadd.f32 %v653, %v691
  %693 = vmatmul.bf16.gmra.mxu0 %v291
  %v694 = vpop.f32.mrf.mxu0
  %v695 = vadd.f32 %v656, %v694
  %v696 = vpop.f32.mrf.mxu0
  %v697 = vadd.f32 %v658, %v696
  %698 = vmatmul.bf16.gmra.mxu0 %v297
  %v699 = vpop.f32.mrf.mxu0
  %v700 = vadd.f32 %v661, %v699
  %v701 = vpop.f32.mrf.mxu0
  %v702 = vadd.f32 %v663, %v701
  %703 = vdwg.mxu0
  %704 = vmatpush.bf16.msra.mxu0 %v553
  %705 = vmatpush.bf16.msra.mxu0 %v552
  %706 = vmatpush.bf16.msra.mxu0 %v551
  %707 = vmatpush.bf16.msra.mxu0 %v550
  %708 = vmatpush.bf16.msra.mxu0 %v549
  %709 = vmatpush.bf16.msra.mxu0 %v548
  %710 = vmatpush.bf16.msra.mxu0 %v547
  %711 = vmatpush.bf16.msra.mxu0 %v546
  %712 = vmatmul.bf16.gmra.mxu0 %v268
  %v713 = vpop.f32.mrf.mxu0
  %v714 = vadd.f32 %v675, %v713
  %v715 = vpop.f32.mrf.mxu0
  %v716 = vadd.f32 %v677, %v715
  %717 = vmatmul.bf16.gmra.mxu0 %v274
  %v718 = vpop.f32.mrf.mxu0
  %v719 = vadd.f32 %v680, %v718
  %v720 = vpop.f32.mrf.mxu0
  %v721 = vadd.f32 %v682, %v720
  %722 = vmatmul.bf16.gmra.mxu0 %v280
  %v723 = vpop.f32.mrf.mxu0
  %v724 = vadd.f32 %v685, %v723
  %v725 = vpop.f32.mrf.mxu0
  %v726 = vadd.f32 %v687, %v725
  %727 = vmatmul.bf16.gmra.mxu0 %v286
  %v728 = vpop.f32.mrf.mxu0
  %v729 = vadd.f32 %v690, %v728
  %v730 = vpop.f32.mrf.mxu0
  %v731 = vadd.f32 %v692, %v730
  %732 = vmatmul.bf16.gmra.mxu0 %v292
  %v733 = vpop.f32.mrf.mxu0
  %v734 = vadd.f32 %v695, %v733
  %v735 = vpop.f32.mrf.mxu0
  %v736 = vadd.f32 %v697, %v735
  %737 = vmatmul.bf16.gmra.mxu0 %v298
  %v738 = vpop.f32.mrf.mxu0
  %v739 = vadd.f32 %v700, %v738
  %v740 = vpop.f32.mrf.mxu0
  %v741 = vadd.f32 %v702, %v740
  %742 = vdwg.mxu0
  %743 = vmatpush.bf16.msra.mxu0 %v561
  %744 = vmatpush.bf16.msra.mxu0 %v560
  %745 = vmatpush.bf16.msra.mxu0 %v559
  %746 = vmatpush.bf16.msra.mxu0 %v558
  %747 = vmatpush.bf16.msra.mxu0 %v557
  %748 = vmatpush.bf16.msra.mxu0 %v556
  %749 = vmatpush.bf16.msra.mxu0 %v555
  %750 = vmatpush.bf16.msra.mxu0 %v554
  %751 = vmatmul.bf16.gmra.mxu0 %v269
  %v752 = vpop.f32.mrf.mxu0
  %v753 = vadd.f32 %v714, %v752
  %v754 = vpop.f32.mrf.mxu0
  %v755 = vadd.f32 %v716, %v754
  %756 = vmatmul.bf16.gmra.mxu0 %v275
  %v757 = vpop.f32.mrf.mxu0
  %v758 = vadd.f32 %v719, %v757
  %v759 = vpop.f32.mrf.mxu0
  %v760 = vadd.f32 %v721, %v759
  %761 = vmatmul.bf16.gmra.mxu0 %v281
  %v762 = vpop.f32.mrf.mxu0
  %v763 = vadd.f32 %v724, %v762
  %v764 = vpop.f32.mrf.mxu0
  %v765 = vadd.f32 %v726, %v764
  %766 = vmatmul.bf16.gmra.mxu0 %v287
  %v767 = vpop.f32.mrf.mxu0
  %v768 = vadd.f32 %v729, %v767
  %v769 = vpop.f32.mrf.mxu0
  %v770 = vadd.f32 %v731, %v769
  %771 = vmatmul.bf16.gmra.mxu0 %v293
  %v772 = vpop.f32.mrf.mxu0
  %v773 = vadd.f32 %v734, %v772
  %v774 = vpop.f32.mrf.mxu0
  %v775 = vadd.f32 %v736, %v774
  %776 = vmatmul.bf16.gmra.mxu0 %v299
  %v777 = vpop.f32.mrf.mxu0
  %v778 = vadd.f32 %v739, %v777
  %v779 = vpop.f32.mrf.mxu0
  %v780 = vadd.f32 %v741, %v779
  %781 = vdwg.mxu0
  %782 = vmatpush.bf16.msra.mxu0 %v569
  %783 = vmatpush.bf16.msra.mxu0 %v568
  %784 = vmatpush.bf16.msra.mxu0 %v567
  %785 = vmatpush.bf16.msra.mxu0 %v566
  %786 = vmatpush.bf16.msra.mxu0 %v565
  %787 = vmatpush.bf16.msra.mxu0 %v564
  %788 = vmatpush.bf16.msra.mxu0 %v563
  %789 = vmatpush.bf16.msra.mxu0 %v562
  %790 = vmatmul.bf16.gmra.mxu0 %v270
  %v791 = vpop.f32.mrf.mxu0
  %v792 = vadd.f32 %v753, %v791
  %v793 = vpop.f32.mrf.mxu0
  %v794 = vadd.f32 %v755, %v793
  %795 = vmatmul.bf16.gmra.mxu0 %v276
  %v796 = vpop.f32.mrf.mxu0
  %v797 = vadd.f32 %v758, %v796
  %v798 = vpop.f32.mrf.mxu0
  %v799 = vadd.f32 %v760, %v798
  %800 = vmatmul.bf16.gmra.mxu0 %v282
  %v801 = vpop.f32.mrf.mxu0
  %v802 = vadd.f32 %v763, %v801
  %v803 = vpop.f32.mrf.mxu0
  %v804 = vadd.f32 %v765, %v803
  %805 = vmatmul.bf16.gmra.mxu0 %v288
  %v806 = vpop.f32.mrf.mxu0
  %v807 = vadd.f32 %v768, %v806
  %v808 = vpop.f32.mrf.mxu0
  %v809 = vadd.f32 %v770, %v808
  %810 = vmatmul.bf16.gmra.mxu0 %v294
  %v811 = vpop.f32.mrf.mxu0
  %v812 = vadd.f32 %v773, %v811
  %v813 = vpop.f32.mrf.mxu0
  %v814 = vadd.f32 %v775, %v813
  %815 = vmatmul.bf16.gmra.mxu0 %v300
  %v816 = vpop.f32.mrf.mxu0
  %v817 = vadd.f32 %v778, %v816
  %v818 = vpop.f32.mrf.mxu0
  %v819 = vadd.f32 %v780, %v818
  %820 = vdwg.mxu0
  %821 = vmatpush.bf16.msra.mxu0 %v577
  %822 = vmatpush.bf16.msra.mxu0 %v576
  %823 = vmatpush.bf16.msra.mxu0 %v575
  %824 = vmatpush.bf16.msra.mxu0 %v574
  %825 = vmatpush.bf16.msra.mxu0 %v573
  %826 = vmatpush.bf16.msra.mxu0 %v572
  %827 = vmatpush.bf16.msra.mxu0 %v571
  %828 = vmatpush.bf16.msra.mxu0 %v570
  %829 = vmatmul.bf16.gmra.mxu0 %v271
  %v830 = vpop.f32.mrf.mxu0
  %v831 = vadd.f32 %v792, %v830
  %v832 = vpop.f32.mrf.mxu0
  %v833 = vadd.f32 %v794, %v832
  %834 = vmatmul.bf16.gmra.mxu0 %v277
  %v835 = vpop.f32.mrf.mxu0
  %v836 = vadd.f32 %v797, %v835
  %v837 = vpop.f32.mrf.mxu0
  %v838 = vadd.f32 %v799, %v837
  %839 = vmatmul.bf16.gmra.mxu0 %v283
  %v840 = vpop.f32.mrf.mxu0
  %v841 = vadd.f32 %v802, %v840
  %v842 = vpop.f32.mrf.mxu0
  %v843 = vadd.f32 %v804, %v842
  %844 = vmatmul.bf16.gmra.mxu0 %v289
  %v845 = vpop.f32.mrf.mxu0
  %v846 = vadd.f32 %v807, %v845
  %v847 = vpop.f32.mrf.mxu0
  %v848 = vadd.f32 %v809, %v847
  %849 = vmatmul.bf16.gmra.mxu0 %v295
  %v850 = vpop.f32.mrf.mxu0
  %v851 = vadd.f32 %v812, %v850
  %v852 = vpop.f32.mrf.mxu0
  %v853 = vadd.f32 %v814, %v852
  %854 = vmatmul.bf16.gmra.mxu0 %v301
  %v855 = vpop.f32.mrf.mxu0
  %v856 = vadd.f32 %v817, %v855
  %v857 = vpop.f32.mrf.mxu0
  %v858 = vadd.f32 %v819, %v857
  %859 = vdwg.mxu0
  %v860 = vmax.f32 %v831, 0.0
  %v861 = vmax.f32 %v833, 0.0
  %v862 = vmax.f32 %v836, 0.0
  %v863 = vmax.f32 %v838, 0.0
  %v864 = vmax.f32 %v841, 0.0
  %v865 = vmax.f32 %v843, 0.0
  %v866 = vmax.f32 %v846, 0.0
  %v867 = vmax.f32 %v848, 0.0
  %v868 = vmax.f32 %v851, 0.0
  %v869 = vmax.f32 %v853, 0.0
  %v870 = vmax.f32 %v856, 0.0
  %v871 = vmax.f32 %v858, 0.0
  %872 = vst [vmem:[%s5] sm:$0xff] %v860
  %873 = vst [vmem:[%s5 + $0x8] sm:$0xff] %v861
  %874 = vst [vmem:[%s5 + $0x10] sm:$0xff] %v862
  %875 = vst [vmem:[%s5 + $0x18] sm:$0xff] %v863
  %876 = vst [vmem:[%s5 + $0x20] sm:$0xff] %v864
  %877 = vst [vmem:[%s5 + $0x28] sm:$0xff] %v865
  %878 = vst [vmem:[%s5 + $0x30] sm:$0xff] %v866
  %879 = vst [vmem:[%s5 + $0x38] sm:$0xff] %v867
  %880 = vst [vmem:[%s5 + $0x40] sm:$0xff] %v868
  %881 = vst [vmem:[%s5 + $0x48] sm:$0xff] %v869
  %882 = vst [vmem:[%s5 + $0x50] sm:$0xff] %v870
  %883 = vst [vmem:[%s5 + $0x58] sm:$0xff] %v871
  %v884 = vld [vmem:[%s3] sm:$0xf]
  %v885 = vld [vmem:[%s3 + $0x4] sm:$0xf]
  %v886 = vld [vmem:[%s3 + $0x8] sm:$0xf]
  %v887 = vld [vmem:[%s3 + $0xc] sm:$0xf]
  %v888 = vld [vmem:[%s3 + $0x10] sm:$0xf]
  %v889 = vld [vmem:[%s3 + $0x14] sm:$0xf]
  %v890 = vld [vmem:[%s3 + $0x18] sm:$0xf]
  %v891 = vld [vmem:[%s3 + $0x1c] sm:$0xf]
  %v892 = vld [vmem:[%s3 + $0x20] sm:$0xf]
  %v893 = vld [vmem:[%s3 + $0x24] sm:$0xf]
  %v894 = vld [vmem:[%s3 + $0x28] sm:$0xf]
  %v895 = vld [vmem:[%s3 + $0x2c] sm:$0xf]
  %v896 = vld [vmem:[%s3 + $0x30] sm:$0xf]
  %v897 = vld [vmem:[%s3 + $0x34] sm:$0xf]
  %v898 = vld [vmem:[%s3 + $0x38] sm:$0xf]
  %v899 = vld [vmem:[%s3 + $0x3c] sm:$0xf]
  %v900 = vld [vmem:[%s4] sm:$0xf]
  %v901 = vld [vmem:[%s4 + $0x4] sm:$0xf]
  %v902 = vld [vmem:[%s4 + $0x8] sm:$0xf]
  %v903 = vld [vmem:[%s4 + $0xc] sm:$0xf]
  %v904 = vld [vmem:[%s4 + $0x10] sm:$0xf]
  %v905 = vld [vmem:[%s4 + $0x14] sm:$0xf]
  %v906 = vld [vmem:[%s4 + $0x18] sm:$0xf]
  %v907 = vld [vmem:[%s4 + $0x1c] sm:$0xf]
  %v908 = vld [vmem:[%s4 + $0x20] sm:$0xf]
  %v909 = vld [vmem:[%s4 + $0x24] sm:$0xf]
  %v910 = vld [vmem:[%s4 + $0x28] sm:$0xf]
  %v911 = vld [vmem:[%s4 + $0x2c] sm:$0xf]
  %v912 = vld [vmem:[%s4 + $0x30] sm:$0xf]
  %v913 = vld [vmem:[%s4 + $0x34] sm:$0xf]
  %v914 = vld [vmem:[%s4 + $0x38] sm:$0xf]
  %v915 = vld [vmem:[%s4 + $0x3c] sm:$0xf]
  %v916 = vrot.slane %v865, 7
  %v917 = vadd.f32 %v865, %v916
  %v918 = vrot.slane %v865, 1
  %v919 = vadd.f32 %v917, %v918
  %v920 = vmul.f32 %v919, 0.33333334
  %v921 = vpack.c.bf16 %v920, %v920
  %v938 = vunpack.c.l.b16 %v884
  %v939 = vunpack.c.l.b16 %v885
  %v940 = vunpack.c.l.b16 %v886
  %v941 = vunpack.c.l.b16 %v887
  %v942 = vunpack.c.l.b16 %v888
  %v943 = vunpack.c.l.b16 %v889
  %v944 = vunpack.c.l.b16 %v890
  %v945 = vunpack.c.l.b16 %v891
  %v946 = vunpack.c.l.b16 %v892
  %v947 = vunpack.c.l.b16 %v893
  %v948 = vunpack.c.l.b16 %v894
  %v949 = vunpack.c.l.b16 %v895
  %v950 = vunpack.c.l.b16 %v896
  %v951 = vunpack.c.l.b16 %v897
  %v952 = vunpack.c.l.b16 %v898
  %v953 = vunpack.c.l.b16 %v899
  %v954 = vpack.c.b16 %v939, %v938
  %v955 = vpack.c.b16 %v941, %v940
  %v956 = vpack.c.b16 %v943, %v942
  %v957 = vpack.c.b16 %v945, %v944
  %v958 = vpack.c.b16 %v947, %v946
  %v959 = vpack.c.b16 %v949, %v948
  %v960 = vpack.c.b16 %v951, %v950
  %v961 = vpack.c.b16 %v953, %v952
  %970 = vmatpush.bf16.msra.mxu0 %v961
  %971 = vmatpush.bf16.msra.mxu0 %v960
  %972 = vmatpush.bf16.msra.mxu0 %v959
  %973 = vmatpush.bf16.msra.mxu0 %v958
  %974 = vmatpush.bf16.msra.mxu0 %v957
  %975 = vmatpush.bf16.msra.mxu0 %v956
  %976 = vmatpush.bf16.msra.mxu0 %v955
  %977 = vmatpush.bf16.msra.mxu0 %v954
  %978 = vmatmul.bf16.gmra.mxu0 %v921
  %v979 = vpop.f32.mrf.mxu0
  %v980 = vadd.f32 0.0, %v979
  %v981 = vpop.f32.mrf.mxu0
  %982 = vdwg.mxu0
  %v983 = vmax.f32 %v980, 0.0
  %v984 = vrot.slane %v983, 7
  %v985 = vadd.f32 %v983, %v984
  %v986 = vrot.slane %v983, 1
  %v987 = vadd.f32 %v985, %v986
  %v988 = vmul.f32 %v987, 0.33333334
  %v989 = vpack.c.bf16 %v988, %v988
  %v1006 = vunpack.c.l.b16 %v900
  %v1007 = vunpack.c.l.b16 %v901
  %v1008 = vunpack.c.l.b16 %v902
  %v1009 = vunpack.c.l.b16 %v903
  %v1010 = vunpack.c.l.b16 %v904
  %v1011 = vunpack.c.l.b16 %v905
  %v1012 = vunpack.c.l.b16 %v906
  %v1013 = vunpack.c.l.b16 %v907
  %v1014 = vunpack.c.l.b16 %v908
  %v1015 = vunpack.c.l.b16 %v909
  %v1016 = vunpack.c.l.b16 %v910
  %v1017 = vunpack.c.l.b16 %v911
  %v1018 = vunpack.c.l.b16 %v912
  %v1019 = vunpack.c.l.b16 %v913
  %v1020 = vunpack.c.l.b16 %v914
  %v1021 = vunpack.c.l.b16 %v915
  %v1022 = vpack.c.b16 %v1007, %v1006
  %v1023 = vpack.c.b16 %v1009, %v1008
  %v1024 = vpack.c.b16 %v1011, %v1010
  %v1025 = vpack.c.b16 %v1013, %v1012
  %v1026 = vpack.c.b16 %v1015, %v1014
  %v1027 = vpack.c.b16 %v1017, %v1016
  %v1028 = vpack.c.b16 %v1019, %v1018
  %v1029 = vpack.c.b16 %v1021, %v1020
  %1038 = vmatpush.bf16.msra.mxu0 %v1029
  %1039 = vmatpush.bf16.msra.mxu0 %v1028
  %1040 = vmatpush.bf16.msra.mxu0 %v1027
  %1041 = vmatpush.bf16.msra.mxu0 %v1026
  %1042 = vmatpush.bf16.msra.mxu0 %v1025
  %1043 = vmatpush.bf16.msra.mxu0 %v1024
  %1044 = vmatpush.bf16.msra.mxu0 %v1023
  %1045 = vmatpush.bf16.msra.mxu0 %v1022
  %1046 = vmatmul.bf16.gmra.mxu0 %v989
  %v1047 = vpop.f32.mrf.mxu0
  %v1048 = vadd.f32 0.0, %v1047
  %v1049 = vpop.f32.mrf.mxu0
  %1050 = vdwg.mxu0
  %1051 = vst [vmem:[%s6] sm:$0xff] %v1048
  %v1052 = vrot.slane %v871, 7
  %v1053 = vadd.f32 %v871, %v1052
  %v1054 = vrot.slane %v871, 1
  %v1055 = vadd.f32 %v1053, %v1054
  %v1056 = vmul.f32 %v1055, 0.33333334
  %v1057 = vpack.c.bf16 %v1056, %v1056
  %1058 = vmatpush.bf16.msra.mxu0 %v961
  %1059 = vmatpush.bf16.msra.mxu0 %v960
  %1060 = vmatpush.bf16.msra.mxu0 %v959
  %1061 = vmatpush.bf16.msra.mxu0 %v958
  %1062 = vmatpush.bf16.msra.mxu0 %v957
  %1063 = vmatpush.bf16.msra.mxu0 %v956
  %1064 = vmatpush.bf16.msra.mxu0 %v955
  %1065 = vmatpush.bf16.msra.mxu0 %v954
  %1066 = vmatmul.bf16.gmra.mxu0 %v1057
  %v1067 = vpop.f32.mrf.mxu0
  %v1068 = vadd.f32 0.0, %v1067
  %v1069 = vpop.f32.mrf.mxu0
  %1070 = vdwg.mxu0
  %v1071 = vmax.f32 %v1068, 0.0
  %v1072 = vrot.slane %v1071, 7
  %v1073 = vadd.f32 %v1071, %v1072
  %v1074 = vrot.slane %v1071, 1
  %v1075 = vadd.f32 %v1073, %v1074
  %v1076 = vmul.f32 %v1075, 0.33333334
  %v1077 = vpack.c.bf16 %v1076, %v1076
  %1078 = vmatpush.bf16.msra.mxu0 %v1029
  %1079 = vmatpush.bf16.msra.mxu0 %v1028
  %1080 = vmatpush.bf16.msra.mxu0 %v1027
  %1081 = vmatpush.bf16.msra.mxu0 %v1026
  %1082 = vmatpush.bf16.msra.mxu0 %v1025
  %1083 = vmatpush.bf16.msra.mxu0 %v1024
  %1084 = vmatpush.bf16.msra.mxu0 %v1023
  %1085 = vmatpush.bf16.msra.mxu0 %v1022
  %1086 = vmatmul.bf16.gmra.mxu0 %v1077
  %v1087 = vpop.f32.mrf.mxu0
  %v1088 = vadd.f32 0.0, %v1087
  %v1089 = vpop.f32.mrf.mxu0
  %1090 = vdwg.mxu0
  %s1091 = scalar_lea.vmem %s6, 8
  %1092 = vst [vmem:[%s1091] sm:$0xff] %v1088
  // Predicated region
  $region22: #{patch_model_forward.1} parent=0 // pred_check
    _
  $region23: #{patch_model_forward.1} parent=0 // pred_check_branch
    %1094 = sbr.rel (0) target = $region25
  $region24: #{patch_model_forward.1} parent=0 // pred_region
    _
  $region25: #{patch_model_forward.1} parent=0 // pred_fallthru
    _
  // Predicated region
  $region26: #{patch_model_forward.1} parent=0 // pred_check
    _
  $region27: #{patch_model_forward.1} parent=0 // pred_check_branch
    %1096 = sbr.rel (0) target = $region29
  $region28: #{patch_model_forward.1} parent=0 // pred_region
    _
  $region29: #{patch_model_forward.1} parent=0 // pred_fallthru
    _
  // Predicated region
  $region30: #{patch_model_forward.1} parent=0 // pred_check
    _
  $region31: #{patch_model_forward.1} parent=0 // pred_check_branch
    %1098 = sbr.rel (0) target = $region33
  $region32: #{patch_model_forward.1} parent=0 // pred_region
    _
  $region33: #{patch_model_forward.1} parent=0 // pred_fallthru
    _
  // Predicated region
  $region34: #{patch_model_forward.1} parent=0 // pred_check
    _
  $region35: #{patch_model_forward.1} parent=0 // pred_check_branch
    %1100 = sbr.rel (0) target = $region37
  $region36: #{patch_model_forward.1} parent=0 // pred_region
    _
  $region37: #{patch_model_forward.1} parent=0 // pred_fallthru
    _

</llo_original>
